<compile_context>
chip_gen: v5e
topology: v5e:2x2
jax: 0.10.0
libtpu: 0.0.40
codegen_flags: <defaults>
</compile_context>

<pallas_src>
import functools

import jax
import jax.numpy as jnp
from jax.experimental import pallas as pl
from jax.experimental.pallas import tpu as pltpu

LANE = 128
SUBLANE = 16  # bf16 sublane packing; also satisfies the f32 8-row rule.


def _round_up(n, m):
    return ((n + m - 1) // m) * m


def _pad2(a, rows, cols):
    r, c = a.shape
    return jnp.pad(a, ((0, rows - r), (0, cols - c)))


def _bf16_elementwise_ok():
    """bf16 VPU/EUP path exists on v6e/v7x; v5e would only emulate it."""
    try:
        kind = jax.devices()[0].device_kind.lower()
    except Exception:
        return False
    return any(tag in kind for tag in ("v6", "v7", "7x", "6e"))


def mlp_kernel(x_ref, w1_ref, b1_ref, w2_ref, b2_ref, w3_ref, b3_ref, o_ref,
               *, out_dim, act_dtype):
    # x arrives as f32 (unpadded lanes); cast to bf16 in-kernel for the MXU.
    x = x_ref[...].astype(jnp.bfloat16)

    # Layer 1: Linear + Sigmoid (f32 accumulation, activation in act_dtype).
    h1 = jnp.dot(x, w1_ref[...], preferred_element_type=jnp.float32) + b1_ref[...]
    h1 = jax.nn.sigmoid(h1.astype(act_dtype))

    # Layer 2: Linear + Sigmoid.
    h2 = jnp.dot(h1.astype(jnp.bfloat16), w2_ref[...],
                 preferred_element_type=jnp.float32) + b2_ref[...]
    h2 = jax.nn.sigmoid(h2.astype(act_dtype))

    # Layer 3: Linear.
    logits = jnp.dot(h2.astype(jnp.bfloat16), w3_ref[...],
                     preferred_element_type=jnp.float32) + b3_ref[...]

    # Mask zero-padded logit lanes so they don't contribute exp(0) to the sum.
    lane = jax.lax.broadcasted_iota(jnp.int32, logits.shape, 1)
    logits = jnp.where(lane < out_dim, logits, jnp.finfo(jnp.float32).min)

    # Numerically stable softmax in f32; approx reciprocal on the EUP slot with
    # one Newton-Raphson refinement (two VPU FMAs) to restore normalization.
    m = jnp.max(logits, axis=-1, keepdims=True)
    e = jnp.exp(logits - m)
    denom = jnp.sum(e, axis=-1, keepdims=True)
    inv = pl.reciprocal(denom, approx=True)
    inv = inv * (2.0 - denom * inv)
    o_ref[...] = (e * inv).astype(o_ref.dtype)


def pad_params(params):
    """Pad/cast weights once at init time (hoisted out of the per-call path).

    Weights are stored (in, out).  Only output (lane) dims are padded to 128;
    the first matmul's K stays at input_dim since the block equals the full
    array.  Weights -> bf16 (MXU operands), biases stay f32 (added post-accum).
    """
    w1, b1, w2, b2, w3, b3 = (params[k] for k in ("w1", "b1", "w2", "b2", "w3", "b3"))
    input_dim, h0 = w1.shape
    h1d = w2.shape[1]
    out_dim = w3.shape[1]
    d_h0, d_h1, d_out = (_round_up(d, LANE) for d in (h0, h1d, out_dim))

    padded = {
        "w1": _pad2(w1, input_dim, d_h0).astype(jnp.bfloat16),
        "b1": _pad2(b1, 1, d_h0),
        "w2": _pad2(w2, d_h0, d_h1).astype(jnp.bfloat16),
        "b2": _pad2(b2, 1, d_h1),
        "w3": _pad2(w3, d_h1, d_out).astype(jnp.bfloat16),
        "b3": _pad2(b3, 1, d_out),
    }
    return padded, out_dim


def _vmem_limit_bytes(batch_tile, input_dim, d_h0, d_h1, d_out, out_bytes):
    """Scoped-VMEM request derived from actual block sizes (+ headroom)."""
    x_tile = batch_tile * input_dim * 4                       # f32 input tile
    weights = (input_dim * d_h0 + d_h0 * d_h1 + d_h1 * d_out) * 2
    biases = (d_h0 + d_h1 + d_out) * 4
    o_tile = batch_tile * d_out * out_bytes
    inter = 4 * batch_tile * max(d_h0, d_h1, d_out) * 4       # live intermediates
    need = 2 * (x_tile + weights + biases + o_tile) + inter   # double buffering
    return int(min(max(need + (4 << 20), 16 << 20), 48 << 20))


def mlp_forward(x, padded_params, out_dim, *, out_dtype=jnp.float32):
    """x: (B, input_dim) f32.  padded_params: output of pad_params()."""
    B, input_dim = x.shape
    w1p, b1p, w2p, b2p, w3p, b3p = (padded_params[k]
                                    for k in ("w1", "b1", "w2", "b2", "w3", "b3"))
    d_h0, d_h1, d_out = w1p.shape[1], w2p.shape[1], w3p.shape[1]

    # Batch tiling: tiles of up to 1024 rows; force >= 2 grid steps whenever the
    # batch allows so v7x can shard the "parallel" axis over both TensorCores.
    B16 = _round_up(B, SUBLANE)
    if B16 <= SUBLANE:
        batch_tile = B16
    else:
        batch_tile = min(1024, _round_up(pl.cdiv(B16, 2), SUBLANE))
    B_pad = _round_up(B, batch_tile)

    # Only pad the batch dim (and only if needed); lanes stay at input_dim.
    xp = x if B_pad == B else jnp.pad(x, ((0, B_pad - B), (0, 0)))

    act_dtype = jnp.bfloat16 if _bf16_elementwise_ok() else jnp.float32

    grid = (B_pad // batch_tile,)
    # Constant index_map -> weights/biases stay resident in VMEM across steps.
    resident = lambda shape: pl.BlockSpec(shape, lambda i: (0, 0))

    out_padded = pl.pallas_call(
        functools.partial(mlp_kernel, out_dim=out_dim, act_dtype=act_dtype),
        out_shape=jax.ShapeDtypeStruct((B_pad, d_out), out_dtype),
        grid_spec=pl.GridSpec(
            grid=grid,
            in_specs=[
                # x tile: last dim == full array dim, so no 128 padding needed.
                pl.BlockSpec((batch_tile, input_dim), lambda i: (i, 0)),
                resident((input_dim, d_h0)),   # w1
                resident((1, d_h0)),           # b1
                resident((d_h0, d_h1)),        # w2
                resident((1, d_h1)),           # b2
                resident((d_h1, d_out)),       # w3
                resident((1, d_out)),          # b3
            ],
            # Lane-dense (multiple-of-128) output block -> unmasked stores.
            out_specs=pl.BlockSpec((batch_tile, d_out), lambda i: (i, 0)),
        ),
        compiler_params=pltpu.CompilerParams(
            dimension_semantics=("parallel",),
            vmem_limit_bytes=_vmem_limit_bytes(
                batch_tile, input_dim, d_h0, d_h1, d_out,
                jnp.dtype(out_dtype).itemsize),
        ),
    )(xp, w1p, b1p, w2p, b2p, w3p, b3p)

    # Kept for exact module semantics; drop if the consumer can take the padded
    # block (it re-reads the full 128-lane output stream just to narrow it).
    return out_padded[:B, :out_dim]


def init_params(key, input_dim, hidden_dim, output_dim):
    """Deterministic init mimicking PyTorch nn.Linear U(-1/sqrt(fan_in), +)."""
    dims = [input_dim, hidden_dim[0], hidden_dim[1], output_dim]
    params = {}
    for i in range(3):
        fan_in, fan_out = dims[i], dims[i + 1]
        key, kw, kb = jax.random.split(key, 3)
        bound = 1.0 / (fan_in ** 0.5)
        # stored pre-transposed: (in, out)
        params[f"w{i+1}"] = jax.random.uniform(
            kw, (fan_in, fan_out), jnp.float32, -bound, bound)
        params[f"b{i+1}"] = jax.random.uniform(
            kb, (1, fan_out), jnp.float32, -bound, bound)
    return params


def mlp_reference(x, params):
    h = jax.nn.sigmoid(x @ params["w1"] + params["b1"])
    h = jax.nn.sigmoid(h @ params["w2"] + params["b2"])
    logits = h @ params["w3"] + params["b3"]
    return jax.nn.softmax(logits, axis=-1)


if __name__ == "__main__":
    key = jax.random.PRNGKey(0)
    batch, input_dim = 16, 32
    hidden_dim = [64, 32]
    output_dim = 16

    key, kx = jax.random.split(key)
    x = jax.random.normal(kx, (batch, input_dim), jnp.float32)
    params = init_params(key, input_dim, hidden_dim, output_dim)

    padded_params, out_dim = pad_params(params)   # one-time padding/cast

    out = mlp_forward(x, padded_params, out_dim)
    out = jax.block_until_ready(out)

    ref = mlp_reference(x, params)
    assert out.shape == (batch, output_dim)
    # bf16 MXU operands (+ optional bf16 sigmoids) -> loosened tolerances.
    assert jnp.allclose(out, ref, atol=2e-2, rtol=2e-2)
    assert jnp.allclose(jnp.sum(out, axis=-1), 1.0, atol=1e-3)

    print("KERNEL_OK")
</pallas_src>

<mosaic_0001>
module attributes {stable_mosaic.version = 11 : i64} {
  func.func @mlp_kernel(%arg0: i32, %arg1: memref<16x32xf32, #tpu.memory_space<vmem>>, %arg2: memref<32x128xbf16, #tpu.memory_space<vmem>>, %arg3: memref<1x128xf32, #tpu.memory_space<vmem>>, %arg4: memref<128x128xbf16, #tpu.memory_space<vmem>>, %arg5: memref<1x128xf32, #tpu.memory_space<vmem>>, %arg6: memref<128x128xbf16, #tpu.memory_space<vmem>>, %arg7: memref<1x128xf32, #tpu.memory_space<vmem>>, %arg8: memref<16x128xf32, #tpu.memory_space<vmem>>) attributes {dimension_semantics = [#tpu.dimension_semantics<parallel>], iteration_bounds = array<i64: 1>, scalar_prefetch = 0 : i64, scratch_operands = 0 : i64, tpu.core_type = #tpu.core_type<tc>, window_params = [{transform_indices = @transform_0, window_bounds = array<i64: 16, 32>}, {pipeline_mode = #tpu.pipeline_mode<synchronous>, transform_indices = @transform_1, window_bounds = array<i64: 32, 128>}, {pipeline_mode = #tpu.pipeline_mode<synchronous>, transform_indices = @transform_2, window_bounds = array<i64: 1, 128>}, {pipeline_mode = #tpu.pipeline_mode<synchronous>, transform_indices = @transform_3, window_bounds = array<i64: 128, 128>}, {pipeline_mode = #tpu.pipeline_mode<synchronous>, transform_indices = @transform_4, window_bounds = array<i64: 1, 128>}, {pipeline_mode = #tpu.pipeline_mode<synchronous>, transform_indices = @transform_5, window_bounds = array<i64: 128, 128>}, {pipeline_mode = #tpu.pipeline_mode<synchronous>, transform_indices = @transform_6, window_bounds = array<i64: 1, 128>}, {transform_indices = @transform_7, window_bounds = array<i64: 16, 128>}]} {
    %c0 = arith.constant 0 : index
    %c0_0 = arith.constant 0 : index
    %0 = vector.load %arg1[%c0, %c0_0] : memref<16x32xf32, #tpu.memory_space<vmem>>, vector<16x32xf32>
    %1 = arith.truncf %0 : vector<16x32xf32> to vector<16x32xbf16>
    %c0_1 = arith.constant 0 : index
    %c0_2 = arith.constant 0 : index
    %2 = vector.load %arg2[%c0_1, %c0_2] : memref<32x128xbf16, #tpu.memory_space<vmem>>, vector<32x128xbf16>
    %cst = arith.constant dense<0.000000e+00> : vector<16x128xf32>
    %3 = tpu.matmul %1, %2, %cst {dimension_numbers = #tpu.dot_dimension_numbers<[1], [0], [0], [1], [0, 0, 1, 1], [], []>} : vector<16x32xbf16>, vector<32x128xbf16>, vector<16x128xf32> -> vector<16x128xf32>
    %c0_3 = arith.constant 0 : index
    %c0_4 = arith.constant 0 : index
    %4 = vector.load %arg3[%c0_3, %c0_4] : memref<1x128xf32, #tpu.memory_space<vmem>>, vector<1x128xf32>
    %5 = vector.broadcast %4 : vector<1x128xf32> to vector<16x128xf32>
    %6 = arith.addf %3, %5 : vector<16x128xf32>
    %7 = arith.negf %6 : vector<16x128xf32>
    %8 = math.exp %7 : vector<16x128xf32>
    %cst_5 = arith.constant 1.000000e+00 : f32
    %9 = vector.broadcast %cst_5 : f32 to vector<16x128xf32>
    %10 = arith.addf %9, %8 : vector<16x128xf32>
    %11 = arith.divf %9, %10 : vector<16x128xf32>
    %12 = arith.truncf %11 : vector<16x128xf32> to vector<16x128xbf16>
    %c0_6 = arith.constant 0 : index
    %c0_7 = arith.constant 0 : index
    %13 = vector.load %arg4[%c0_6, %c0_7] : memref<128x128xbf16, #tpu.memory_space<vmem>>, vector<128x128xbf16>
    %cst_8 = arith.constant dense<0.000000e+00> : vector<16x128xf32>
    %14 = tpu.matmul %12, %13, %cst_8 {dimension_numbers = #tpu.dot_dimension_numbers<[1], [0], [0], [1], [0, 0, 1, 1], [], []>} : vector<16x128xbf16>, vector<128x128xbf16>, vector<16x128xf32> -> vector<16x128xf32>
    %c0_9 = arith.constant 0 : index
    %c0_10 = arith.constant 0 : index
    %15 = vector.load %arg5[%c0_9, %c0_10] : memref<1x128xf32, #tpu.memory_space<vmem>>, vector<1x128xf32>
    %16 = vector.broadcast %15 : vector<1x128xf32> to vector<16x128xf32>
    %17 = arith.addf %14, %16 : vector<16x128xf32>
    %18 = arith.negf %17 : vector<16x128xf32>
    %19 = math.exp %18 : vector<16x128xf32>
    %cst_11 = arith.constant 1.000000e+00 : f32
    %20 = vector.broadcast %cst_11 : f32 to vector<16x128xf32>
    %21 = arith.addf %20, %19 : vector<16x128xf32>
    %22 = arith.divf %20, %21 : vector<16x128xf32>
    %23 = arith.truncf %22 : vector<16x128xf32> to vector<16x128xbf16>
    %c0_12 = arith.constant 0 : index
    %c0_13 = arith.constant 0 : index
    %24 = vector.load %arg6[%c0_12, %c0_13] : memref<128x128xbf16, #tpu.memory_space<vmem>>, vector<128x128xbf16>
    %cst_14 = arith.constant dense<0.000000e+00> : vector<16x128xf32>
    %25 = tpu.matmul %23, %24, %cst_14 {dimension_numbers = #tpu.dot_dimension_numbers<[1], [0], [0], [1], [0, 0, 1, 1], [], []>} : vector<16x128xbf16>, vector<128x128xbf16>, vector<16x128xf32> -> vector<16x128xf32>
    %c0_15 = arith.constant 0 : index
    %c0_16 = arith.constant 0 : index
    %26 = vector.load %arg7[%c0_15, %c0_16] : memref<1x128xf32, #tpu.memory_space<vmem>>, vector<1x128xf32>
    %27 = vector.broadcast %26 : vector<1x128xf32> to vector<16x128xf32>
    %28 = arith.addf %25, %27 : vector<16x128xf32>
    %29 = tpu.iota {dimensions = array<i32: 1>} : vector<16x128xi32>
    %c16_i32 = arith.constant 16 : i32
    %30 = vector.broadcast %c16_i32 : i32 to vector<16x128xi32>
    %31 = arith.cmpi slt, %29, %30 : vector<16x128xi32>
    %cst_17 = arith.constant -3.40282347E+38 : f32
    %32 = vector.broadcast %cst_17 : f32 to vector<16x128xf32>
    %33 = arith.select %31, %28, %32 : vector<16x128xi1>, vector<16x128xf32>
    %cst_18 = arith.constant dense<0xFF800000> : vector<16xf32>
    %34 = vector.multi_reduction <maximumf>, %33, %cst_18 [1] : vector<16x128xf32> to vector<16xf32>
    %35 = vector.shape_cast %34 : vector<16xf32> to vector<16x1xf32>
    %36 = vector.broadcast %35 : vector<16x1xf32> to vector<16x128xf32>
    %37 = arith.subf %33, %36 : vector<16x128xf32>
    %38 = math.exp %37 : vector<16x128xf32>
    %cst_19 = arith.constant dense<0.000000e+00> : vector<16xf32>
    %39 = vector.multi_reduction <add>, %38, %cst_19 [1] : vector<16x128xf32> to vector<16xf32>
    %40 = vector.shape_cast %39 : vector<16xf32> to vector<16x1xf32>
    %41 = tpu.reciprocal %40 {approx = true} : vector<16x1xf32> -> vector<16x1xf32>
    %42 = arith.mulf %40, %41 : vector<16x1xf32>
    %cst_20 = arith.constant 2.000000e+00 : f32
    %43 = vector.broadcast %cst_20 : f32 to vector<16x1xf32>
    %44 = arith.subf %43, %42 : vector<16x1xf32>
    %45 = arith.mulf %41, %44 : vector<16x1xf32>
    %46 = vector.broadcast %45 : vector<16x1xf32> to vector<16x128xf32>
    %47 = arith.mulf %38, %46 : vector<16x128xf32>
    %c0_21 = arith.constant 0 : index
    %c0_22 = arith.constant 0 : index
    %48 = vector.load %arg8[%c0_21, %c0_22] : memref<16x128xf32, #tpu.memory_space<vmem>>, vector<16x128xf32>
    tpu.vector_store %arg8[%c0_21, %c0_22], %47 {strides = array<i32>} : memref<16x128xf32, #tpu.memory_space<vmem>>, vector<16x128xf32>,
    return
  }
  func.func @transform_0(%arg0: i32) -> (i32, i32) {
    %c0_i32 = arith.constant 0 : i32
    %c0_i32_0 = arith.constant 0 : i32
    return %arg0, %c0_i32 : i32, i32
  }
  func.func @transform_1(%arg0: i32) -> (i32, i32) {
    %c0_i32 = arith.constant 0 : i32
    %c0_i32_0 = arith.constant 0 : i32
    %c0_i32_1 = arith.constant 0 : i32
    return %c0_i32, %c0_i32_0 : i32, i32
  }
  func.func @transform_2(%arg0: i32) -> (i32, i32) {
    %c0_i32 = arith.constant 0 : i32
    %c0_i32_0 = arith.constant 0 : i32
    %c0_i32_1 = arith.constant 0 : i32
    return %c0_i32, %c0_i32_0 : i32, i32
  }
  func.func @transform_3(%arg0: i32) -> (i32, i32) {
    %c0_i32 = arith.constant 0 : i32
    %c0_i32_0 = arith.constant 0 : i32
    %c0_i32_1 = arith.constant 0 : i32
    return %c0_i32, %c0_i32_0 : i32, i32
  }
  func.func @transform_4(%arg0: i32) -> (i32, i32) {
    %c0_i32 = arith.constant 0 : i32
    %c0_i32_0 = arith.constant 0 : i32
    %c0_i32_1 = arith.constant 0 : i32
    return %c0_i32, %c0_i32_0 : i32, i32
  }
  func.func @transform_5(%arg0: i32) -> (i32, i32) {
    %c0_i32 = arith.constant 0 : i32
    %c0_i32_0 = arith.constant 0 : i32
    %c0_i32_1 = arith.constant 0 : i32
    return %c0_i32, %c0_i32_0 : i32, i32
  }
  func.func @transform_6(%arg0: i32) -> (i32, i32) {
    %c0_i32 = arith.constant 0 : i32
    %c0_i32_0 = arith.constant 0 : i32
    %c0_i32_1 = arith.constant 0 : i32
    return %c0_i32, %c0_i32_0 : i32, i32
  }
  func.func @transform_7(%arg0: i32) -> (i32, i32) {
    %c0_i32 = arith.constant 0 : i32
    %c0_i32_0 = arith.constant 0 : i32
    return %arg0, %c0_i32 : i32, i32
  }
}

</mosaic_0001>

<llo_original>
// kernel: tpu_custom_call.1
$region0: #{tpu_custom_call.1}
  #allocation0 [shape = 'u32[]', space=smem, size = 0x4, offset = 0x4, fixed_abs, tag = 'smem constant byte address 0x4 - core index']
  #allocation1 [shape = 'u32[72,128]{1,0:T(1,128)}', space=vmem, size = 0x9000, scoped, tag = 'internal scratch']
  %s0 = inlined_call_operand.hbm [shape: f32[16,32], index: 0, kind: input, shape index: {}]
  %s1 = inlined_call_operand.hbm [shape: bf16[32,128], index: 1, kind: input, shape index: {}]
  %s2 = inlined_call_operand.vmem [shape: f32[1,128], index: 2, kind: input, shape index: {}]
  %s3 = inlined_call_operand.hbm [shape: bf16[128,128], index: 3, kind: input, shape index: {}]
  %s4 = inlined_call_operand.vmem [shape: f32[1,128], index: 4, kind: input, shape index: {}]
  %s5 = inlined_call_operand.hbm [shape: bf16[128,128], index: 5, kind: input, shape index: {}]
  %s6 = inlined_call_operand.vmem [shape: f32[1,128], index: 6, kind: input, shape index: {}]
  %s7 = inlined_call_operand.hbm [shape: f32[16,128], index: 7, kind: output, shape index: {}]
  %s8 = sld [smem:[#allocation0]]
  $region54: #{tpu_custom_call.1} parent=0
    _
  %s10 = ssub.s32 1, %s8
  %s11 = scalar_select 0, %s10, %s8
  $region1: #{tpu_custom_call.1} parent=0
    #allocation2 [shape = 'u8[8192]{0}', space=vmem, size = 0x2000, scoped, tag = 'input window, operand 0, single buffered']
    #allocation3 [shape = 's32[1]{0}', space=sflag, size = 0x4, scoped, tag = 'scoped memory for tpu_custom_call.1']
    #allocation4 [shape = 's32[1]{0}', space=sflag, size = 0x4, scoped, tag = 'scoped memory for tpu_custom_call.1']
    #allocation5 [shape = 'u8[8192]{0}', space=vmem, size = 0x2000, scoped, tag = 'input window, operand 1, single buffered']
    #allocation6 [shape = 's32[1]{0}', space=sflag, size = 0x4, scoped, tag = 'scoped memory for tpu_custom_call.1']
    #allocation7 [shape = 'u8[32768]{0}', space=vmem, size = 0x8000, scoped, tag = 'input window, operand 3, single buffered']
    #allocation8 [shape = 'u8[32768]{0}', space=vmem, size = 0x8000, scoped, tag = 'input window, operand 5, single buffered']
    #allocation9 [shape = 's32[1]{0}', space=sflag, size = 0x4, scoped, tag = 'scoped memory for tpu_custom_call.1']
    #allocation10 [shape = 'u8[8192]{0}', space=vmem, size = 0x2000, scoped, tag = 'output window, operand 0, single buffered']
    %12 = vsyncpa [#allocation3], 0
    %13 = vsyncpa [#allocation6], 0
    %14 = vsyncpa [#allocation9], 0
    %15 = vsyncpa [#allocation4], 0
    // Predicated region
    $region2: #{tpu_custom_call.1} parent=1 // pred_check
      _
    $region3: #{tpu_custom_call.1} parent=1 // pred_check_branch
      %17 = sbr.rel (0) target = $region5
    $region4: #{tpu_custom_call.1} parent=1 // pred_region
      %19 = vsyncadd [#allocation3], 0
      %s20 = sshll.u32 %s0, 4
      %s21 = int_to_ptr.hbm [resolvable:$true] %s20
      %s22 = sshll.u32 [#allocation2], 4
      %s23 = int_to_ptr.vmem [resolvable:$true] %s22
      %28 = dma.hbm_to_vmem [thread:$0]  %s21, 256, %s23, [#allocation3], 128, 128, 8
    $region5: #{tpu_custom_call.1} parent=1 // pred_fallthru
      _
    // Predicated region
    $region6: #{tpu_custom_call.1} parent=1 // pred_check
      _
    $region7: #{tpu_custom_call.1} parent=1 // pred_check_branch
      %30 = sbr.rel (0) target = $region9
    $region8: #{tpu_custom_call.1} parent=1 // pred_region
      %32 = vsyncadd [#allocation6], 0
      %s33 = sshll.u32 %s1, 4
      %s34 = int_to_ptr.hbm [resolvable:$true] %s33
      %s35 = sshll.u32 [#allocation5], 4
      %s36 = int_to_ptr.vmem [resolvable:$true] %s35
      %41 = dma.hbm_to_vmem [thread:$0]  %s34, 256, %s36, [#allocation6], 64, 64, 4
    $region9: #{tpu_custom_call.1} parent=1 // pred_fallthru
      _
    // Predicated region
    $region10: #{tpu_custom_call.1} parent=1 // pred_check
      _
    $region11: #{tpu_custom_call.1} parent=1 // pred_check_branch
      %43 = sbr.rel (0) target = $region13
    $region12: #{tpu_custom_call.1} parent=1 // pred_region
      _
    $region13: #{tpu_custom_call.1} parent=1 // pred_fallthru
      _
    // Predicated region
    $region14: #{tpu_custom_call.1} parent=1 // pred_check
      _
    $region15: #{tpu_custom_call.1} parent=1 // pred_check_branch
      %45 = sbr.rel (0) target = $region17
    $region16: #{tpu_custom_call.1} parent=1 // pred_region
      %47 = vsyncadd [#allocation6], 0
      %s48 = sshll.u32 %s3, 4
      %s49 = int_to_ptr.hbm [resolvable:$true] %s48
      %s50 = sshll.u32 [#allocation7], 4
      %s51 = int_to_ptr.vmem [resolvable:$true] %s50
      %56 = dma.hbm_to_vmem [thread:$0]  %s49, 1024, %s51, [#allocation6], 64, 64, 4
    $region17: #{tpu_custom_call.1} parent=1 // pred_fallthru
      _
    // Predicated region
    $region18: #{tpu_custom_call.1} parent=1 // pred_check
      _
    $region19: #{tpu_custom_call.1} parent=1 // pred_check_branch
      %58 = sbr.rel (0) target = $region21
    $region20: #{tpu_custom_call.1} parent=1 // pred_region
      _
    $region21: #{tpu_custom_call.1} parent=1 // pred_fallthru
      _
    // Predicated region
    $region22: #{tpu_custom_call.1} parent=1 // pred_check
      _
    $region23: #{tpu_custom_call.1} parent=1 // pred_check_branch
      %60 = sbr.rel (0) target = $region25
    $region24: #{tpu_custom_call.1} parent=1 // pred_region
      %62 = vsyncadd [#allocation9], 0
      %s63 = sshll.u32 %s5, 4
      %s64 = int_to_ptr.hbm [resolvable:$true] %s63
      %s65 = sshll.u32 [#allocation8], 4
      %s66 = int_to_ptr.vmem [resolvable:$true] %s65
      %71 = dma.hbm_to_vmem [thread:$0]  %s64, 1024, %s66, [#allocation9], 64, 64, 4
    $region25: #{tpu_custom_call.1} parent=1 // pred_fallthru
      _
    // Predicated region
    $region26: #{tpu_custom_call.1} parent=1 // pred_check
      _
    $region27: #{tpu_custom_call.1} parent=1 // pred_check_branch
      %73 = sbr.rel (0) target = $region29
    $region28: #{tpu_custom_call.1} parent=1 // pred_region
      _
    $region29: #{tpu_custom_call.1} parent=1 // pred_fallthru
      _
    // Predicated region
    $region30: #{tpu_custom_call.1} parent=1 // pred_check
      _
    $region31: #{tpu_custom_call.1} parent=1 // pred_check_branch
      %75 = sbr.rel (0) target = $region33
    $region32: #{tpu_custom_call.1} parent=1 // pred_region
      %77 = dma.done [#allocation3], 256
    $region33: #{tpu_custom_call.1} parent=1 // pred_fallthru
      _
    // Predicated region
    $region34: #{tpu_custom_call.1} parent=1 // pred_check
      _
    $region35: #{tpu_custom_call.1} parent=1 // pred_check_branch
      %79 = sbr.rel (0) target = $region37
    $region36: #{tpu_custom_call.1} parent=1 // pred_region
      %81 = dma.done [#allocation6], 256
    $region37: #{tpu_custom_call.1} parent=1 // pred_fallthru
      _
    // Predicated region
    $region38: #{tpu_custom_call.1} parent=1 // pred_check
      _
    $region39: #{tpu_custom_call.1} parent=1 // pred_check_branch
      %83 = sbr.rel (0) target = $region41
    $region40: #{tpu_custom_call.1} parent=1 // pred_region
      %85 = dma.done [#allocation6], 1024
    $region41: #{tpu_custom_call.1} parent=1 // pred_fallthru
      _
    // Predicated region
    $region42: #{tpu_custom_call.1} parent=1 // pred_check
      _
    $region43: #{tpu_custom_call.1} parent=1 // pred_check_branch
      %87 = sbr.rel (0) target = $region45
    $region44: #{tpu_custom_call.1} parent=1 // pred_region
      %89 = dma.done [#allocation9], 1024
    $region45: #{tpu_custom_call.1} parent=1 // pred_fallthru
      _
    %v91 = vld [vmem:[#allocation2] sm:$0xff]
    %v92 = vld [vmem:[#allocation2 + $0x8] sm:$0xff]
    %v93 = vpack.c.bf16 %v92, %v91
    %v94 = vld [vmem:[#allocation5] sm:$0xf]
    %v95 = vld [vmem:[#allocation5 + $0x4] sm:$0xf]
    %v96 = vld [vmem:[#allocation5 + $0x8] sm:$0xf]
    %v97 = vld [vmem:[#allocation5 + $0xc] sm:$0xf]
    %v98 = vld [vmem:[%s2] sm:$0x1]
    %v100 = vperm.slane %v98, 0
    %v106 = vunpack.c.l.b16 %v94
    %v107 = vunpack.c.l.b16 %v95
    %v108 = vunpack.c.l.b16 %v96
    %v109 = vunpack.c.l.b16 %v97
    %v110 = vpack.c.b16 %v107, %v106
    %v111 = vpack.c.b16 %v109, %v108
    %vm114 = vcmask 261120
    %v116 = vsel %vm114, %v93, 0
    %118 = vmatpush.bf16.msra.mxu0 0
    %119 = vmatpush.bf16.msra.mxu0 0
    %120 = vmatpush.bf16.msra.mxu0 0
    %121 = vmatpush.bf16.msra.mxu0 0
    %122 = vmatpush.bf16.msra.mxu0 0
    %123 = vmatpush.bf16.msra.mxu0 0
    %124 = vmatpush.bf16.msra.mxu0 %v111
    %125 = vmatpush.bf16.msra.mxu0 %v110
    %126 = vmatmul.bf16.gmra.mxu0 %v116
    %v127 = vpop.f32.mrf.mxu0
    %v128 = vadd.f32 %v100, %v127
    %v129 = vpop.f32.mrf.mxu0
    %v130 = vadd.f32 %v100, %v129
    %131 = vdwg.mxu0
    %v132 = vxor.u32 %v128, 2147483648
    %v133 = vxor.u32 %v130, 2147483648
    %v134 = vmul.f32 %v132, 1.442695
    %v135 = vpow.pop %v134
    %v136 = vmul.f32 %v133, 1.442695
    %v137 = vpow.pop %v136
    %v138 = vadd.f32 %v135, 1.0
    %v139 = vadd.f32 %v137, 1.0
    %v140 = vrcp.pop %v138
    %v141 = vmul.f32 %v138, %v140
    %v142 = vsub.f32 1.0, %v141
    %v143 = vmul.f32 %v140, %v142
    %v144 = vadd.f32 %v140, %v143
    %vm145 = vweird.f32 %v138
    %vm146 = vweird.f32 %v140
    %vm147 = vmor %vm145, %vm146
    %v148 = vsel %vm147, %v140, %v144
    %v149 = vand.u32 2147483647, %v138
    %vm150 = vcmp.eq.f32.partialorder %v149, 8.507059e+37
    %v151 = vand.u32 %v138, 2147483648
    %v152 = vor.u32 1.1754944e-38, %v151
    %v153 = vsel %vm150, %v152, %v148
    %v154 = vmul.f32 1.0, %v153
    %v155 = vrcp.pop %v139
    %v156 = vmul.f32 %v139, %v155
    %v157 = vsub.f32 1.0, %v156
    %v158 = vmul.f32 %v155, %v157
    %v159 = vadd.f32 %v155, %v158
    %vm160 = vweird.f32 %v139
    %vm161 = vweird.f32 %v155
    %vm162 = vmor %vm160, %vm161
    %v163 = vsel %vm162, %v155, %v159
    %v164 = vand.u32 2147483647, %v139
    %vm165 = vcmp.eq.f32.partialorder %v164, 8.507059e+37
    %v166 = vand.u32 %v139, 2147483648
    %v167 = vor.u32 1.1754944e-38, %v166
    %v168 = vsel %vm165, %v167, %v163
    %v169 = vmul.f32 1.0, %v168
    %v170 = vpack.c.bf16 %v169, %v154
    %v171 = vld [vmem:[#allocation7] sm:$0xf]
    %v172 = vld [vmem:[#allocation7 + $0x4] sm:$0xf]
    %v173 = vld [vmem:[#allocation7 + $0x8] sm:$0xf]
    %v174 = vld [vmem:[#allocation7 + $0xc] sm:$0xf]
    %v175 = vld [vmem:[#allocation7 + $0x10] sm:$0xf]
    %v176 = vld [vmem:[#allocation7 + $0x14] sm:$0xf]
    %v177 = vld [vmem:[#allocation7 + $0x18] sm:$0xf]
    %v178 = vld [vmem:[#allocation7 + $0x1c] sm:$0xf]
    %v179 = vld [vmem:[#allocation7 + $0x20] sm:$0xf]
    %v180 = vld [vmem:[#allocation7 + $0x24] sm:$0xf]
    %v181 = vld [vmem:[#allocation7 + $0x28] sm:$0xf]
    %v182 = vld [vmem:[#allocation7 + $0x2c] sm:$0xf]
    %v183 = vld [vmem:[#allocation7 + $0x30] sm:$0xf]
    %v184 = vld [vmem:[#allocation7 + $0x34] sm:$0xf]
    %v185 = vld [vmem:[#allocation7 + $0x38] sm:$0xf]
    %v186 = vld [vmem:[#allocation7 + $0x3c] sm:$0xf]
    %v187 = vld [vmem:[%s4] sm:$0x1]
    %v189 = vperm.slane %v187, 0
    %v207 = vunpack.c.l.b16 %v171
    %v208 = vunpack.c.l.b16 %v172
    %v209 = vunpack.c.l.b16 %v173
    %v210 = vunpack.c.l.b16 %v174
    %v211 = vunpack.c.l.b16 %v175
    %v212 = vunpack.c.l.b16 %v176
    %v213 = vunpack.c.l.b16 %v177
    %v214 = vunpack.c.l.b16 %v178
    %v215 = vunpack.c.l.b16 %v179
    %v216 = vunpack.c.l.b16 %v180
    %v217 = vunpack.c.l.b16 %v181
    %v218 = vunpack.c.l.b16 %v182
    %v219 = vunpack.c.l.b16 %v183
    %v220 = vunpack.c.l.b16 %v184
    %v221 = vunpack.c.l.b16 %v185
    %v222 = vunpack.c.l.b16 %v186
    %v223 = vpack.c.b16 %v208, %v207
    %v224 = vpack.c.b16 %v210, %v209
    %v225 = vpack.c.b16 %v212, %v211
    %v226 = vpack.c.b16 %v214, %v213
    %v227 = vpack.c.b16 %v216, %v215
    %v228 = vpack.c.b16 %v218, %v217
    %v229 = vpack.c.b16 %v220, %v219
    %v230 = vpack.c.b16 %v222, %v221
    %239 = vmatpush.bf16.msra.mxu0 %v230
    %240 = vmatpush.bf16.msra.mxu0 %v229
    %241 = vmatpush.bf16.msra.mxu0 %v228
    %242 = vmatpush.bf16.msra.mxu0 %v227
    %243 = vmatpush.bf16.msra.mxu0 %v226
    %244 = vmatpush.bf16.msra.mxu0 %v225
    %245 = vmatpush.bf16.msra.mxu0 %v224
    %246 = vmatpush.bf16.msra.mxu0 %v223
    %247 = vmatmul.bf16.gmra.mxu0 %v170
    %v248 = vpop.f32.mrf.mxu0
    %v249 = vadd.f32 %v189, %v248
    %v250 = vpop.f32.mrf.mxu0
    %v251 = vadd.f32 %v189, %v250
    %252 = vdwg.mxu0
    %v253 = vxor.u32 %v249, 2147483648
    %v254 = vxor.u32 %v251, 2147483648
    %v255 = vmul.f32 %v253, 1.442695
    %v256 = vpow.pop %v255
    %v257 = vmul.f32 %v254, 1.442695
    %v258 = vpow.pop %v257
    %v259 = vadd.f32 %v256, 1.0
    %v260 = vadd.f32 %v258, 1.0
    %v261 = vrcp.pop %v259
    %v262 = vmul.f32 %v259, %v261
    %v263 = vsub.f32 1.0, %v262
    %v264 = vmul.f32 %v261, %v263
    %v265 = vadd.f32 %v261, %v264
    %vm266 = vweird.f32 %v259
    %vm267 = vweird.f32 %v261
    %vm268 = vmor %vm266, %vm267
    %v269 = vsel %vm268, %v261, %v265
    %v270 = vand.u32 2147483647, %v259
    %vm271 = vcmp.eq.f32.partialorder %v270, 8.507059e+37
    %v272 = vand.u32 %v259, 2147483648
    %v273 = vor.u32 1.1754944e-38, %v272
    %v274 = vsel %vm271, %v273, %v269
    %v275 = vmul.f32 1.0, %v274
    %v276 = vrcp.pop %v260
    %v277 = vmul.f32 %v260, %v276
    %v278 = vsub.f32 1.0, %v277
    %v279 = vmul.f32 %v276, %v278
    %v280 = vadd.f32 %v276, %v279
    %vm281 = vweird.f32 %v260
    %vm282 = vweird.f32 %v276
    %vm283 = vmor %vm281, %vm282
    %v284 = vsel %vm283, %v276, %v280
    %v285 = vand.u32 2147483647, %v260
    %vm286 = vcmp.eq.f32.partialorder %v285, 8.507059e+37
    %v287 = vand.u32 %v260, 2147483648
    %v288 = vor.u32 1.1754944e-38, %v287
    %v289 = vsel %vm286, %v288, %v284
    %v290 = vmul.f32 1.0, %v289
    %v291 = vpack.c.bf16 %v290, %v275
    %v292 = vld [vmem:[#allocation8] sm:$0xf]
    %v293 = vld [vmem:[#allocation8 + $0x4] sm:$0xf]
    %v294 = vld [vmem:[#allocation8 + $0x8] sm:$0xf]
    %v295 = vld [vmem:[#allocation8 + $0xc] sm:$0xf]
    %v296 = vld [vmem:[#allocation8 + $0x10] sm:$0xf]
    %v297 = vld [vmem:[#allocation8 + $0x14] sm:$0xf]
    %v298 = vld [vmem:[#allocation8 + $0x18] sm:$0xf]
    %v299 = vld [vmem:[#allocation8 + $0x1c] sm:$0xf]
    %v300 = vld [vmem:[#allocation8 + $0x20] sm:$0xf]
    %v301 = vld [vmem:[#allocation8 + $0x24] sm:$0xf]
    %v302 = vld [vmem:[#allocation8 + $0x28] sm:$0xf]
    %v303 = vld [vmem:[#allocation8 + $0x2c] sm:$0xf]
    %v304 = vld [vmem:[#allocation8 + $0x30] sm:$0xf]
    %v305 = vld [vmem:[#allocation8 + $0x34] sm:$0xf]
    %v306 = vld [vmem:[#allocation8 + $0x38] sm:$0xf]
    %v307 = vld [vmem:[#allocation8 + $0x3c] sm:$0xf]
    %v308 = vld [vmem:[%s6] sm:$0x1]
    %v310 = vperm.slane %v308, 0
    %v328 = vunpack.c.l.b16 %v292
    %v329 = vunpack.c.l.b16 %v293
    %v330 = vunpack.c.l.b16 %v294
    %v331 = vunpack.c.l.b16 %v295
    %v332 = vunpack.c.l.b16 %v296
    %v333 = vunpack.c.l.b16 %v297
    %v334 = vunpack.c.l.b16 %v298
    %v335 = vunpack.c.l.b16 %v299
    %v336 = vunpack.c.l.b16 %v300
    %v337 = vunpack.c.l.b16 %v301
    %v338 = vunpack.c.l.b16 %v302
    %v339 = vunpack.c.l.b16 %v303
    %v340 = vunpack.c.l.b16 %v304
    %v341 = vunpack.c.l.b16 %v305
    %v342 = vunpack.c.l.b16 %v306
    %v343 = vunpack.c.l.b16 %v307
    %v344 = vpack.c.b16 %v329, %v328
    %v345 = vpack.c.b16 %v331, %v330
    %v346 = vpack.c.b16 %v333, %v332
    %v347 = vpack.c.b16 %v335, %v334
    %v348 = vpack.c.b16 %v337, %v336
    %v349 = vpack.c.b16 %v339, %v338
    %v350 = vpack.c.b16 %v341, %v340
    %v351 = vpack.c.b16 %v343, %v342
    %360 = vmatpush.bf16.msra.mxu0 %v351
    %361 = vmatpush.bf16.msra.mxu0 %v350
    %362 = vmatpush.bf16.msra.mxu0 %v349
    %363 = vmatpush.bf16.msra.mxu0 %v348
    %364 = vmatpush.bf16.msra.mxu0 %v347
    %365 = vmatpush.bf16.msra.mxu0 %v346
    %366 = vmatpush.bf16.msra.mxu0 %v345
    %367 = vmatpush.bf16.msra.mxu0 %v344
    %368 = vmatmul.bf16.gmra.mxu0 %v291
    %v369 = vpop.f32.mrf.mxu0
    %v370 = vadd.f32 %v310, %v369
    %v371 = vpop.f32.mrf.mxu0
    %v372 = vadd.f32 %v310, %v371
    %373 = vdwg.mxu0
    %v374 = vlaneseq
    %v375 = vand.u32 %v374, 127
    %vm376 = vcmp.lt.s32.totalorder %v375, 16
    %v377 = vsel %vm376, %v370, -3.4028235e+38
    %v378 = vsel %vm376, %v372, -3.4028235e+38
    %379 = vmax.xlane.f32.xlu0 %v377
    %v380 = vpop.xlane.xlu0 %379
    %381 = vmax.xlane.f32.xlu0 %v378
    %v382 = vpop.xlane.xlu0 %381
    %v383 = vsub.f32 %v377, %v380
    %v384 = vsub.f32 %v378, %v382
    %v385 = vmul.f32 %v383, 1.442695
    %v386 = vpow.pop %v385
    %v387 = vmul.f32 %v384, 1.442695
    %v388 = vpow.pop %v387
    %389 = vadd.xlane.f32.xlu0 %v386
    %v390 = vpop.xlane.xlu0 %389
    %391 = vadd.xlane.f32.xlu0 %v388
    %v392 = vpop.xlane.xlu0 %391
    %v393 = vrcp.pop %v390
    %v394 = vrcp.pop %v392
    %v395 = vmul.f32 %v390, %v393
    %v396 = vmul.f32 %v392, %v394
    %v397 = vsub.f32 2.0, %v395
    %v398 = vsub.f32 2.0, %v396
    %v399 = vmul.f32 %v393, %v397
    %v400 = vmul.f32 %v394, %v398
    %v401 = vmul.f32 %v386, %v399
    %v402 = vmul.f32 %v388, %v400
    %403 = vst [vmem:[#allocation10] sm:$0xff] %v401
    %404 = vst [vmem:[#allocation10 + $0x8] sm:$0xff] %v402
    // Predicated region
    $region46: #{tpu_custom_call.1} parent=1 // pred_check
      _
    $region47: #{tpu_custom_call.1} parent=1 // pred_check_branch
      %406 = sbr.rel (0) target = $region49
    $region48: #{tpu_custom_call.1} parent=1 // pred_region
      %408 = vsyncadd [#allocation4], 0
      %s409 = sshll.u32 [#allocation10], 4
      %s410 = int_to_ptr.vmem [resolvable:$true] %s409
      %s411 = sshll.u32 %s7, 4
      %s412 = int_to_ptr.hbm [resolvable:$true] %s411
      %417 = dma.vmem_to_hbm [thread:$0]  %s410, 256, %s412, [#allocation4], 128, 128, 8
    $region49: #{tpu_custom_call.1} parent=1 // pred_fallthru
      _
    // Predicated region
    $region50: #{tpu_custom_call.1} parent=1 // pred_check
      _
    $region51: #{tpu_custom_call.1} parent=1 // pred_check_branch
      %419 = sbr.rel (0) target = $region53
    $region52: #{tpu_custom_call.1} parent=1 // pred_region
      %421 = dma.done [#allocation4], 256
    $region53: #{tpu_custom_call.1} parent=1 // pred_fallthru
      _
    %422 = vsyncpa [#allocation3], 1
    %423 = vsyncpa [#allocation6], 1
    %424 = vsyncpa [#allocation9], 1
    %425 = vsyncpa [#allocation4], 1

</llo_original>
